<compile_context>
chip_gen: v6e
topology: v6e:2x2x1
jax: 0.10.0
libtpu: 0.0.40
codegen_flags: <defaults>
</compile_context>

<pallas_src>
import functools

import jax
import jax.numpy as jnp
from jax import lax
from jax.experimental import pallas as pl
from jax.experimental.pallas import tpu as pltpu

# ~2 MiB (f32) per input tile per grid step: big enough for >85% of HBM
# bandwidth, small enough that double-buffered inputs + accumulator fit the
# default/explicit scoped VMEM on every generation (incl. v7x's 64 MiB).
_TARGET_BLOCK_ELEMS = 512 * 1024
_VMEM_LIMIT_BYTES = 32 * 1024 * 1024


def _smape_sum_kernel(im_ref, ref_ref, out_ref, acc_ref, *,
                      eps, rows, block_rows, steps, needs_mask):
    c = pl.program_id(0)   # core / split index (parallel axis)
    i = pl.program_id(1)   # sequential reduction step within this split

    @pl.when(i == 0)
    def _init():
        acc_ref[...] = jnp.zeros_like(acc_ref)

    im = im_ref[...].astype(jnp.float32)
    rf = ref_ref[...].astype(jnp.float32)
    # elementwise SMAPE term: abs/add/sub on VPU, divide on EUP
    term = jnp.abs(im - rf) / (eps + jnp.abs(im) + jnp.abs(rf))

    if needs_mask:
        # Ragged last block: zero rows that fall outside the real array
        # (Pallas does not zero-fill partial edge blocks).
        start = (c * steps + i) * block_rows
        row_ids = start + lax.broadcasted_iota(jnp.int32, term.shape, 0)
        term = jnp.where(row_ids < rows, term, 0.0)

    # Block-shaped accumulator: pure VPU adds per step, no per-step cross-lane
    # reduce or SMEM scalar read-modify-write on the critical path.
    acc_ref[...] += term

    @pl.when(i == steps - 1)
    def _finalize():
        out_ref[...] = jnp.sum(acc_ref[...]).reshape(1, 1, 1)


def smape_loss(im, ref, eps=1e-4):
    """Pallas implementation of smapeLoss.forward (scalar f32 result)."""
    assert im.shape == ref.shape, "im and ref must have the same shape"
    n = im.size

    im_flat = jnp.ravel(im)     # free reshape; dtype kept (upcast in-kernel)
    ref_flat = jnp.ravel(ref)

    if n % 128 != 0:
        # TODO(synk): rare ragged path -- pads to a lane multiple, costing one
        # extra HBM copy of both inputs (padded zeros contribute exactly 0).
        pad = (-n) % 128
        im_flat = jnp.pad(im_flat, (0, pad))
        ref_flat = jnp.pad(ref_flat, (0, pad))
    n_pad = im_flat.shape[0]

    # Widest lane width that divides the element count -> lane-dense slab.
    lanes = 512 if n_pad % 512 == 0 else (256 if n_pad % 256 == 0 else 128)
    rows = n_pad // lanes
    im2 = im_flat.reshape(rows, lanes)
    ref2 = ref_flat.reshape(rows, lanes)

    block_rows = min(rows, max(8, _TARGET_BLOCK_ELEMS // lanes))
    total_blocks = pl.cdiv(rows, block_rows)
    # Split the reduction across 2 TensorCores (v7x); harmless on single-TC
    # chips. Only when the block count splits evenly (no fully-OOB blocks).
    splits = 2 if (total_blocks >= 2 and total_blocks % 2 == 0) else 1
    steps = total_blocks // splits
    needs_mask = (rows % block_rows) != 0

    kernel = functools.partial(
        _smape_sum_kernel, eps=float(eps), rows=rows,
        block_rows=block_rows, steps=steps, needs_mask=needs_mask)

    in_map = lambda c, i: (c * steps + i, 0)
    bytes_in = im2.size * im2.dtype.itemsize + ref2.size * ref2.dtype.itemsize

    partials = pl.pallas_call(
        kernel,
        out_shape=jax.ShapeDtypeStruct((splits, 1, 1), jnp.float32),
        grid_spec=pltpu.PrefetchScalarGridSpec(
            num_scalar_prefetch=0,
            grid=(splits, steps),
            in_specs=[
                pl.BlockSpec((block_rows, lanes), in_map),
                pl.BlockSpec((block_rows, lanes), in_map),
            ],
            out_specs=pl.BlockSpec((1, 1, 1), lambda c, i: (c, 0, 0)),
            scratch_shapes=[pltpu.VMEM((block_rows, lanes), jnp.float32)],
        ),
        compiler_params=pltpu.CompilerParams(
            dimension_semantics=("parallel", "arbitrary"),
            vmem_limit_bytes=_VMEM_LIMIT_BYTES,
        ),
        cost_estimate=pl.CostEstimate(
            flops=6 * n, transcendentals=n,
            bytes_accessed=bytes_in + 4 * splits),
    )(im2, ref2)

    # mean over the *original* element count, then / 3 (trivial glue)
    total = jnp.sum(partials)
    return total / jnp.float32(n) / jnp.float32(3.0)


def _smape_loss_reference(im, ref, eps=1e-4):
    im = im.astype(jnp.float32)
    ref = ref.astype(jnp.float32)
    val = jnp.abs(im - ref) / (eps + jnp.abs(im) + jnp.abs(ref))
    return jnp.mean(val) / 3.0


if __name__ == "__main__":
    key = jax.random.PRNGKey(0)
    k_im, k_ref = jax.random.split(key)

    # NCHW inputs, small shapes
    shape = (2, 4, 16, 16)
    im = jax.random.normal(k_im, shape, dtype=jnp.float32)
    ref = jax.random.normal(k_ref, shape, dtype=jnp.float32)

    out = jax.block_until_ready(smape_loss(im, ref))
    expected = jax.block_until_ready(_smape_loss_reference(im, ref))

    assert out.shape == (), f"expected scalar, got {out.shape}"
    assert jnp.allclose(out, expected, rtol=1e-5, atol=1e-6), (out, expected)

    print("KERNEL_OK")
</pallas_src>

<mosaic_0001>
module attributes {stable_mosaic.version = 11 : i64} {
  func.func @_smape_sum_kernel(%arg0: i32, %arg1: i32, %arg2: memref<4x512xf32, #tpu.memory_space<vmem>>, %arg3: memref<4x512xf32, #tpu.memory_space<vmem>>, %arg4: memref<1x1x1xf32, #tpu.memory_space<vmem>>, %arg5: memref<4x512xf32, #tpu.memory_space<vmem>>) attributes {dimension_semantics = [#tpu.dimension_semantics<parallel>, #tpu.dimension_semantics<arbitrary>], iteration_bounds = array<i64: 1, 1>, scalar_prefetch = 0 : i64, scratch_operands = 1 : i64, tpu.core_type = #tpu.core_type<tc>, window_params = [{transform_indices = @transform_0, window_bounds = array<i64: 4, 512>}, {transform_indices = @transform_1, window_bounds = array<i64: 4, 512>}, {transform_indices = @transform_2, window_bounds = array<i64: 1, 1, 1>}]} {
    %c0_i32 = arith.constant 0 : i32
    %0 = arith.cmpi eq, %arg1, %c0_i32 : i32
    %1 = arith.extui %0 : i1 to i32
    %c0_i32_0 = arith.constant 0 : i32
    %2 = arith.cmpi ne, %1, %c0_i32_0 : i32
    scf.if %2 {
      %cst_10 = arith.constant 0.000000e+00 : f32
      %19 = vector.broadcast %cst_10 : f32 to vector<4x512xf32>
      %c0_11 = arith.constant 0 : index
      %c0_12 = arith.constant 0 : index
      %20 = vector.load %arg5[%c0_11, %c0_12] : memref<4x512xf32, #tpu.memory_space<vmem>>, vector<4x512xf32>
      tpu.vector_store %arg5[%c0_11, %c0_12], %19 {strides = array<i32>} : memref<4x512xf32, #tpu.memory_space<vmem>>, vector<4x512xf32>,
    } else {
    }
    %c0 = arith.constant 0 : index
    %c0_1 = arith.constant 0 : index
    %3 = vector.load %arg2[%c0, %c0_1] : memref<4x512xf32, #tpu.memory_space<vmem>>, vector<4x512xf32>
    %c0_2 = arith.constant 0 : index
    %c0_3 = arith.constant 0 : index
    %4 = vector.load %arg3[%c0_2, %c0_3] : memref<4x512xf32, #tpu.memory_space<vmem>>, vector<4x512xf32>
    %5 = arith.subf %3, %4 : vector<4x512xf32>
    %6 = math.absf %5 : vector<4x512xf32>
    %7 = math.absf %3 : vector<4x512xf32>
    %cst = arith.constant 9.99999974E-5 : f32
    %8 = vector.broadcast %cst : f32 to vector<4x512xf32>
    %9 = arith.addf %8, %7 : vector<4x512xf32>
    %10 = math.absf %4 : vector<4x512xf32>
    %11 = arith.addf %9, %10 : vector<4x512xf32>
    %12 = arith.divf %6, %11 : vector<4x512xf32>
    %c0_4 = arith.constant 0 : index
    %c0_5 = arith.constant 0 : index
    %13 = vector.load %arg5[%c0_4, %c0_5] : memref<4x512xf32, #tpu.memory_space<vmem>>, vector<4x512xf32>
    %14 = arith.addf %13, %12 : vector<4x512xf32>
    %c0_6 = arith.constant 0 : index
    %c0_7 = arith.constant 0 : index
    %15 = vector.load %arg5[%c0_6, %c0_7] : memref<4x512xf32, #tpu.memory_space<vmem>>, vector<4x512xf32>
    tpu.vector_store %arg5[%c0_6, %c0_7], %14 {strides = array<i32>} : memref<4x512xf32, #tpu.memory_space<vmem>>, vector<4x512xf32>,
    %c0_i32_8 = arith.constant 0 : i32
    %16 = arith.cmpi eq, %arg1, %c0_i32_8 : i32
    %17 = arith.extui %16 : i1 to i32
    %c0_i32_9 = arith.constant 0 : i32
    %18 = arith.cmpi ne, %17, %c0_i32_9 : i32
    scf.if %18 {
      %c0_10 = arith.constant 0 : index
      %c0_11 = arith.constant 0 : index
      %19 = vector.load %arg5[%c0_10, %c0_11] : memref<4x512xf32, #tpu.memory_space<vmem>>, vector<4x512xf32>
      %20 = vector.shape_cast %19 : vector<4x512xf32> to vector<1x4x512xf32>
      %cst_12 = arith.constant dense<0.000000e+00> : vector<1xf32>
      %21 = vector.multi_reduction <add>, %20, %cst_12 [1, 2] : vector<1x4x512xf32> to vector<1xf32>
      %22 = vector.shape_cast %21 : vector<1xf32> to vector<1x1x1xf32>
      %23 = vector.extract %22[0, 0, 0] : f32 from vector<1x1x1xf32>
      %24 = vector.broadcast %23 : f32 to vector<1x1x1xf32>
      %c0_13 = arith.constant 0 : index
      %c0_14 = arith.constant 0 : index
      %c0_15 = arith.constant 0 : index
      %25 = vector.load %arg4[%c0_13, %c0_14, %c0_15] : memref<1x1x1xf32, #tpu.memory_space<vmem>>, vector<1x1x1xf32>
      tpu.vector_store %arg4[%c0_13, %c0_14, %c0_15], %24 {strides = array<i32>} : memref<1x1x1xf32, #tpu.memory_space<vmem>>, vector<1x1x1xf32>,
    } else {
    }
    return
  }
  func.func @transform_0(%arg0: i32, %arg1: i32) -> (i32, i32) {
    %c1_i32 = arith.constant 1 : i32
    %0 = arith.muli %arg0, %c1_i32 : i32
    %1 = arith.addi %0, %arg1 : i32
    %c0_i32 = arith.constant 0 : i32
    %c0_i32_0 = arith.constant 0 : i32
    return %1, %c0_i32 : i32, i32
  }
  func.func @transform_1(%arg0: i32, %arg1: i32) -> (i32, i32) {
    %c1_i32 = arith.constant 1 : i32
    %0 = arith.muli %arg0, %c1_i32 : i32
    %1 = arith.addi %0, %arg1 : i32
    %c0_i32 = arith.constant 0 : i32
    %c0_i32_0 = arith.constant 0 : i32
    return %1, %c0_i32 : i32, i32
  }
  func.func @transform_2(%arg0: i32, %arg1: i32) -> (i32, i32, i32) {
    %c0_i32 = arith.constant 0 : i32
    %c0_i32_0 = arith.constant 0 : i32
    %c0_i32_1 = arith.constant 0 : i32
    return %arg0, %c0_i32, %c0_i32_0 : i32, i32, i32
  }
}

</mosaic_0001>

<llo_original>
// kernel: tpu_custom_call.1
$region0: #{tpu_custom_call.1}
  #allocation0 [shape = 'u32[]', space=smem, size = 0x4, offset = 0x4, fixed_abs, tag = 'smem constant byte address 0x4 - core index']
  #allocation1 [shape = 'u32[144,128]{1,0:T(1,128)}', space=vmem, size = 0x12000, scoped, tag = 'internal scratch']
  #allocation2 [shape = 'f32[4,512]{1,0:T(4,128)}', space=vmem, size = 0x2000, scoped, tag = 'scratch operand']
  %s0 = inlined_call_operand.hbm [shape: f32[4,512], index: 0, kind: input, shape index: {}]
  %s1 = inlined_call_operand.hbm [shape: f32[4,512], index: 1, kind: input, shape index: {}]
  %s2 = inlined_call_operand.hbm [shape: f32[1,1,1], index: 2, kind: output, shape index: {}]
  %s3 = sld [smem:[#allocation0]]
  $region34: #{tpu_custom_call.1} parent=0
    _
  %s5 = ssub.s32 1, %s3
  %s6 = scalar_select 0, %s5, %s3
  $region1: #{tpu_custom_call.1} parent=0
    #allocation3 [shape = 'u8[8192]{0}', space=vmem, size = 0x2000, scoped, tag = 'input window, operand 0, single buffered']
    #allocation4 [shape = 's32[1]{0}', space=sflag, size = 0x4, scoped, tag = 'scoped memory for tpu_custom_call.1']
    #allocation5 [shape = 's32[1]{0}', space=sflag, size = 0x4, scoped, tag = 'scoped memory for tpu_custom_call.1']
    #allocation6 [shape = 'u8[8192]{0}', space=vmem, size = 0x2000, scoped, tag = 'input window, operand 1, single buffered']
    #allocation7 [shape = 's32[1]{0}', space=sflag, size = 0x4, scoped, tag = 'scoped memory for tpu_custom_call.1']
    #allocation8 [shape = 'u8[512]{0}', space=vmem, size = 0x400, scoped, tag = 'output window, operand 0, single buffered']
    %7 = vsyncpa [#allocation4], 0
    %8 = vsyncpa [#allocation7], 0
    %9 = vsyncpa [#allocation5], 0
    // Predicated region
    $region2: #{tpu_custom_call.1} parent=1 // pred_check
      _
    $region3: #{tpu_custom_call.1} parent=1 // pred_check_branch
      %11 = sbr.rel (0) target = $region5
    $region4: #{tpu_custom_call.1} parent=1 // pred_region
      %s12 = sadd.s32 0, 0
      %s14 = ssub.s32 256, 256
      %15 = vsyncadd [#allocation4], %s14
      %s16 = smul.addr %s12, 4
      %s17 = smul.addr %s16, 64
      %s18 = scalar_lea.hbm %s0, %s17
      %s20 = sshll.u32 [#allocation3], 4
      %s21 = int_to_ptr.vmem [resolvable:$true] %s20
      %23 = dma.hbm_to_vmem [thread:$0]  %s18, 256, %s21, [#allocation4]
    $region5: #{tpu_custom_call.1} parent=1 // pred_fallthru
      _
    // Predicated region
    $region6: #{tpu_custom_call.1} parent=1 // pred_check
      _
    $region7: #{tpu_custom_call.1} parent=1 // pred_check_branch
      %25 = sbr.rel (0) target = $region9
    $region8: #{tpu_custom_call.1} parent=1 // pred_region
      %s26 = sadd.s32 0, 0
      %s28 = ssub.s32 256, 256
      %29 = vsyncadd [#allocation7], %s28
      %s30 = smul.addr %s26, 4
      %s31 = smul.addr %s30, 64
      %s32 = scalar_lea.hbm %s1, %s31
      %s34 = sshll.u32 [#allocation6], 4
      %s35 = int_to_ptr.vmem [resolvable:$true] %s34
      %37 = dma.hbm_to_vmem [thread:$0]  %s32, 256, %s35, [#allocation7]
    $region9: #{tpu_custom_call.1} parent=1 // pred_fallthru
      _
    // Predicated region
    $region10: #{tpu_custom_call.1} parent=1 // pred_check
      _
    $region11: #{tpu_custom_call.1} parent=1 // pred_check_branch
      %39 = sbr.rel (0) target = $region13
    $region12: #{tpu_custom_call.1} parent=1 // pred_region
      %40 = dma.done [#allocation4], 256
    $region13: #{tpu_custom_call.1} parent=1 // pred_fallthru
      _
    // Predicated region
    $region14: #{tpu_custom_call.1} parent=1 // pred_check
      _
    $region15: #{tpu_custom_call.1} parent=1 // pred_check_branch
      %42 = sbr.rel (0) target = $region17
    $region16: #{tpu_custom_call.1} parent=1 // pred_region
      %43 = dma.done [#allocation7], 256
    $region17: #{tpu_custom_call.1} parent=1 // pred_fallthru
      _
    %s44 = sadd.s32 0, 0
    %s45 = sadd.s32 0, 0
    %p46 = scmp.eq.s32.totalorder 0, 0
    // Predicated region
    $region18: #{tpu_custom_call.1} parent=1 // pred_check
      %p47 = pneg %p46
    $region19: #{tpu_custom_call.1} parent=1 // pred_check_branch
      %49 = sbr.rel (%p47) target = $region21
    $region20: #{tpu_custom_call.1} parent=1 // pred_region
      %50 = vst [vmem:[#allocation2] sm:$0xff] 0.0
      %51 = vst [vmem:[#allocation2 + $0x8] sm:$0xff] 0.0
    $region21: #{tpu_custom_call.1} parent=1 // pred_fallthru
      _
    %v52 = vld [vmem:[#allocation3] sm:$0xff]
    %v53 = vld [vmem:[#allocation3 + $0x8] sm:$0xff]
    %v54 = vld [vmem:[#allocation6] sm:$0xff]
    %v55 = vld [vmem:[#allocation6 + $0x8] sm:$0xff]
    %v56 = vsub.f32 %v52, %v54
    %v57 = vsub.f32 %v53, %v55
    %v58 = vand.u32 2147483647, %v56
    %v59 = vand.u32 2147483647, %v57
    %v60 = vand.u32 2147483647, %v52
    %v61 = vand.u32 2147483647, %v53
    %v62 = vadd.f32 %v60, 0.0001
    %v63 = vadd.f32 %v61, 0.0001
    %v64 = vand.u32 2147483647, %v54
    %v65 = vand.u32 2147483647, %v55
    %v66 = vadd.f32 %v62, %v64
    %v67 = vadd.f32 %v63, %v65
    %v68 = vrcp.pop %v66
    %v69 = vmul.f32 %v58, %v68
    %v70 = vrcp.pop %v67
    %v71 = vmul.f32 %v59, %v70
    %v72 = vld [vmem:[#allocation2] sm:$0xff]
    %v73 = vld [vmem:[#allocation2 + $0x8] sm:$0xff]
    %v74 = vadd.f32 %v72, %v69
    %v75 = vadd.f32 %v73, %v71
    %76 = vst [vmem:[#allocation2] sm:$0xff] %v74
    %77 = vst [vmem:[#allocation2 + $0x8] sm:$0xff] %v75
    // Predicated region
    $region22: #{tpu_custom_call.1} parent=1 // pred_check
      %p78 = pneg %p46
    $region23: #{tpu_custom_call.1} parent=1 // pred_check_branch
      %80 = sbr.rel (%p78) target = $region25
    $region24: #{tpu_custom_call.1} parent=1 // pred_region
      %v81 = vld [vmem:[#allocation2] sm:$0xff]
      %v82 = vld [vmem:[#allocation2 + $0x8] sm:$0xff]
      %v85 = vcombine.high %v81, %v81
      %v86 = vcombine.high %v82, %v82
      %vm89 = vcmask 1043456
      %v90 = vsel %vm89, %v81, 0.0
      %v91 = vsel %vm89, %v85, 0.0
      %v92 = vadd.f32 %v90, %v91
      %v93 = vsel %vm89, %v82, 0.0
      %v94 = vadd.f32 %v92, %v93
      %v95 = vsel %vm89, %v86, 0.0
      %v96 = vadd.f32 %v94, %v95
      %97 = vadd.xlane.f32.xlu0 %v96
      %v98 = vpop.xlane.xlu0 %97
      %v99 = vrot.slane %v98, 4
      %v100 = vadd.f32 %v98, %v99
      %v101 = vrot.slane %v100, 2
      %v102 = vadd.f32 %v100, %v101
      %v103 = vrot.slane %v102, 1
      %v104 = vadd.f32 %v102, %v103
      %s105 = vtos %v104
      %v106 = vstv %s105
      %vm107 = vcmask 0
      %108 = vst.msk [vmem:[#allocation8] sm:$0x1] %vm107, %v106
    $region25: #{tpu_custom_call.1} parent=1 // pred_fallthru
      _
    // Predicated region
    $region26: #{tpu_custom_call.1} parent=1 // pred_check
      _
    $region27: #{tpu_custom_call.1} parent=1 // pred_check_branch
      %110 = sbr.rel (0) target = $region29
    $region28: #{tpu_custom_call.1} parent=1 // pred_region
      %s112 = ssub.s32 16, 16
      %113 = vsyncadd [#allocation5], %s112
      %s115 = sshll.u32 [#allocation8], 4
      %s116 = int_to_ptr.vmem [resolvable:$true] %s115
      %118 = dma.vmem_to_hbm [thread:$0]  %s116, 16, %s2, [#allocation5]
    $region29: #{tpu_custom_call.1} parent=1 // pred_fallthru
      _
    // Predicated region
    $region30: #{tpu_custom_call.1} parent=1 // pred_check
      _
    $region31: #{tpu_custom_call.1} parent=1 // pred_check_branch
      %120 = sbr.rel (0) target = $region33
    $region32: #{tpu_custom_call.1} parent=1 // pred_region
      %121 = dma.done [#allocation5], 16
    $region33: #{tpu_custom_call.1} parent=1 // pred_fallthru
      _
    %122 = vsyncpa [#allocation4], 1
    %123 = vsyncpa [#allocation7], 1
    %124 = vsyncpa [#allocation5], 1

</llo_original>
